<compile_context>
chip_gen: v7x
topology: tpu7x:2x2x1
jax: 0.10.0
libtpu: 0.0.40
codegen_flags: <defaults>
</compile_context>

<pallas_src>
import jax
import jax.numpy as jnp
from jax.experimental import pallas as pl
from jax.experimental.pallas import tpu as pltpu


LANE = 128                       # TPU lane width (last-dim tiling unit).
SUBLANE = 8                      # f32 sublane tiling unit (2nd-to-last dim).
VMEM_BUDGET = 20 * 1024 * 1024   # conservative tile budget: safe on v5e/v6e/v7x
VMEM_LIMIT = 32 * 1024 * 1024    # scoped VMEM limit handed to Mosaic
MIN_PALLAS_FLOPS = 3e5           # below this, plain XLA beats kernel overhead


def _fused_heads_kernel(x_ref, w_ref, b_ref, o_ref):
    # One MXU matmul over the full contraction dim; accumulate in f32.
    acc = jnp.dot(x_ref[...], w_ref[...], preferred_element_type=jnp.float32)
    o_ref[...] = (acc + b_ref[...].astype(jnp.float32)).astype(o_ref.dtype)


def _round_up(v: int, m: int) -> int:
    return ((v + m - 1) // m) * m


def _select_tiles(B: int, F: int, O_pad: int, itemsize: int) -> tuple[int, int]:
    """VMEM-budgeted (batch, output-lane) tile sizes.

    Budget model (bytes): F*tile_o (weights, single-buffered when resident)
                          + 2*tile_b*F + 2*tile_b*tile_o (double-buffered x/out).
    """
    # Output-lane tile: keep every head resident unless the weight slab would
    # eat more than half the budget; then tile the lane axis (multiple of 128).
    tile_o = O_pad
    if F * tile_o * itemsize > VMEM_BUDGET // 2:
        max_lanes = (VMEM_BUDGET // 2) // (F * itemsize)
        tile_o = max(LANE, (min(max_lanes, O_pad) // LANE) * LANE)
    w_bytes = F * tile_o * itemsize

    # Batch tile: target 512 rows (measured ~85% of HBM roofline), clamped so
    # the double-buffered x / out tiles fit in what the weights left over.
    remaining = max(VMEM_BUDGET - w_bytes, VMEM_BUDGET // 4)
    per_row = 2 * (F + tile_o) * itemsize
    tile_b = min(512, max(remaining // per_row, SUBLANE))
    tile_b = max((tile_b // SUBLANE) * SUBLANE, SUBLANE)

    if B <= tile_b:
        if B >= 2 * SUBLANE:
            # Guarantee >=2 grid steps along batch so the "parallel" axis can
            # actually be distributed across v7x's 2 TensorCores.
            tile_b = _round_up(pl.cdiv(B, 2), SUBLANE)
        else:
            tile_b = B  # full-extent block (legal for any small B)
    return tile_b, tile_o


def fused_heads(x: jax.Array, w_cat: jax.Array, b_cat: jax.Array) -> jax.Array:
    """All heads at once: x (B, F) @ w_cat (F, O_pad) + b_cat (1, O_pad)."""
    B, F = x.shape
    Fw, O_pad = w_cat.shape
    assert F == Fw and b_cat.shape == (1, O_pad)
    assert O_pad % LANE == 0, "fused output dim must be lane-padded"
    assert x.dtype == w_cat.dtype, "activation dtype must match weight dtype"

    itemsize = jnp.dtype(x.dtype).itemsize
    tile_b, tile_o = _select_tiles(B, F, O_pad, itemsize)
    grid = (pl.cdiv(B, tile_b), pl.cdiv(O_pad, tile_o))

    # Constant-index (fully resident) weight/bias blocks don't need a second
    # pipeline buffer; reclaim that VMEM.
    resident_kwargs = {"pipeline_mode": pl.Buffered(1)} if grid[1] == 1 else {}

    w_reads = 1 if grid[1] == 1 else grid[0]
    bytes_accessed = (
        B * F * itemsize                      # x (batch axis outermost -> read once)
        + w_reads * F * O_pad * itemsize      # fused W
        + O_pad * itemsize                    # fused bias
        + B * O_pad * itemsize                # output
    )

    return pl.pallas_call(
        _fused_heads_kernel,
        out_shape=jax.ShapeDtypeStruct((B, O_pad), x.dtype),
        grid=grid,
        in_specs=[
            # Batch axis outermost -> x block index is constant across the
            # inner O axis, so its DMA is only issued once per batch tile.
            pl.BlockSpec((tile_b, F), lambda i, j: (i, 0)),
            pl.BlockSpec((F, tile_o), lambda i, j: (0, j), **resident_kwargs),
            pl.BlockSpec((1, tile_o), lambda i, j: (0, j), **resident_kwargs),
        ],
        out_specs=pl.BlockSpec((tile_b, tile_o), lambda i, j: (i, j)),
        compiler_params=pltpu.CompilerParams(
            # Both grid axes are independent -> shardable across v7x megacore.
            dimension_semantics=("parallel", "parallel"),
            vmem_limit_bytes=VMEM_LIMIT,
        ),
        cost_estimate=pl.CostEstimate(
            flops=2 * B * F * O_pad,
            transcendentals=0,
            bytes_accessed=bytes_accessed,
        ),
    )(x, w_cat, b_cat)


class HeadsPallas:
    """Mirror of the PyTorch `Heads` module: a dict of linear heads.

    Per-head weights/biases are concatenated and lane-padded ONCE at
    construction; the forward pass runs one fused Pallas kernel and slices the
    (B, O_pad) slab back into the per-head logits dict.
    """

    def __init__(self, features_dim: int, head_sizes: dict[str, int],
                 key: jax.Array, param_dtype=jnp.float32):
        # NOTE: for best MXU utilization on v6e/v7x keep features_dim a
        # multiple of 128 (the demo uses 128). Any F is still correct since the
        # contraction dim is always a full-extent block.
        self.features_dim = features_dim
        self.head_sizes = dict(head_sizes)
        self.param_dtype = param_dtype

        # Per-head f32 params (kept for reference checks / PyTorch parity),
        # mimicking nn.Linear's uniform(-1/sqrt(F), 1/sqrt(F)) init.
        bound = 1.0 / (features_dim ** 0.5)
        self.params = {}
        for i, (name, n_out) in enumerate(self.head_sizes.items()):
            kw, kb = jax.random.split(jax.random.fold_in(key, i))
            w = jax.random.uniform(kw, (features_dim, n_out), jnp.float32, -bound, bound)
            b = jax.random.uniform(kb, (1, n_out), jnp.float32, -bound, bound)
            self.params[name] = (w, b)

        # ---- Fused, lane-padded weight/bias built once (not per forward). ----
        offsets, off = {}, 0
        for name, n_out in self.head_sizes.items():
            offsets[name] = (off, n_out)
            off += n_out
        self.offsets = offsets
        self.total_out = off
        self.padded_out = _round_up(off, LANE)

        w_cat = jnp.zeros((features_dim, self.padded_out), jnp.float32)
        b_cat = jnp.zeros((1, self.padded_out), jnp.float32)
        for name, (w, b) in self.params.items():
            s, n = offsets[name]
            w_cat = w_cat.at[:, s:s + n].set(w)
            b_cat = b_cat.at[:, s:s + n].set(b)
        # Weights stored in param_dtype (use bf16 for bandwidth-bound
        # deployments); bias stays f32 (negligible bytes, added to the f32
        # accumulator). Padded columns stay exactly zero and are sliced off.
        self.w_cat = w_cat.astype(param_dtype)
        self.b_cat = b_cat

    def __call__(self, x: jax.Array) -> dict[str, jax.Array]:
        if x.dtype != self.w_cat.dtype:
            # Keep activation/weight dtypes matched so the dot isn't silently
            # promoted off the bf16 MXU fast path.
            x = x.astype(self.w_cat.dtype)
        B, F = x.shape
        if 2 * B * F * self.padded_out < MIN_PALLAS_FLOPS:
            # Tiny problem: custom-call + per-grid-step overhead dominates;
            # let XLA fuse a plain dot with its neighbors instead.
            fused = (jnp.dot(x, self.w_cat, preferred_element_type=jnp.float32)
                     + self.b_cat).astype(x.dtype)
        else:
            fused = fused_heads(x, self.w_cat, self.b_cat)
        return {name: fused[:, s:s + n] for name, (s, n) in self.offsets.items()}


if __name__ == "__main__":
    key = jax.random.PRNGKey(0)
    k_x, k_p, k_t = jax.random.split(key, 3)

    # Shapes chosen so the fused Pallas path (not the tiny-size XLA fallback)
    # actually runs: 256 feature rows, 128 backbone features, three heads
    # (19 + 5 + 11 = 35 logits -> lane-padded to 128).
    batch, features_dim = 256, 128
    head_sizes = {"class": 19, "camera_index": 5, "subject_index": 11}

    heads = HeadsPallas(features_dim, head_sizes, k_p)
    x = jax.random.normal(k_x, (batch, features_dim), jnp.float32)

    logits = heads(x)                      # Pallas path (grid=(2,1), tile_b=128)
    jax.block_until_ready(logits)

    for name, (w, b) in heads.params.items():
        ref = x @ w + b
        assert logits[name].shape == (batch, head_sizes[name]), name
        assert jnp.allclose(logits[name], ref, atol=1e-3, rtol=1e-3), name

    # Tiny-batch call exercises the below-threshold plain-XLA fallback.
    x_small = jax.random.normal(k_t, (2, features_dim), jnp.float32)
    logits_small = heads(x_small)
    jax.block_until_ready(logits_small)
    for name, (w, b) in heads.params.items():
        ref = x_small @ w + b
        assert logits_small[name].shape == (2, head_sizes[name]), name
        assert jnp.allclose(logits_small[name], ref, atol=1e-3, rtol=1e-3), name

    print("KERNEL_OK")
</pallas_src>

<mosaic_0001>
module attributes {stable_mosaic.version = 11 : i64} {
  func.func @_fused_heads_kernel(%arg0: i32, %arg1: i32, %arg2: memref<128x128xf32, #tpu.memory_space<vmem>>, %arg3: memref<128x128xf32, #tpu.memory_space<vmem>>, %arg4: memref<1x128xf32, #tpu.memory_space<vmem>>, %arg5: memref<128x128xf32, #tpu.memory_space<vmem>>) attributes {dimension_semantics = [#tpu.dimension_semantics<parallel>, #tpu.dimension_semantics<parallel>], iteration_bounds = array<i64: 2, 1>, scalar_prefetch = 0 : i64, scratch_operands = 0 : i64, tpu.core_type = #tpu.core_type<tc>, window_params = [{transform_indices = @transform_0, window_bounds = array<i64: 128, 128>}, {pipeline_mode = #tpu.pipeline_mode<synchronous>, transform_indices = @transform_1, window_bounds = array<i64: 128, 128>}, {pipeline_mode = #tpu.pipeline_mode<synchronous>, transform_indices = @transform_2, window_bounds = array<i64: 1, 128>}, {transform_indices = @transform_3, window_bounds = array<i64: 128, 128>}]} {
    %c0 = arith.constant 0 : index
    %c0_0 = arith.constant 0 : index
    %0 = vector.load %arg2[%c0, %c0_0] : memref<128x128xf32, #tpu.memory_space<vmem>>, vector<128x128xf32>
    %c0_1 = arith.constant 0 : index
    %c0_2 = arith.constant 0 : index
    %1 = vector.load %arg3[%c0_1, %c0_2] : memref<128x128xf32, #tpu.memory_space<vmem>>, vector<128x128xf32>
    %cst = arith.constant dense<0.000000e+00> : vector<128x128xf32>
    %2 = tpu.matmul %0, %1, %cst {dimension_numbers = #tpu.dot_dimension_numbers<[1], [0], [0], [1], [0, 0, 1, 1], [], []>} : vector<128x128xf32>, vector<128x128xf32>, vector<128x128xf32> -> vector<128x128xf32>
    %c0_3 = arith.constant 0 : index
    %c0_4 = arith.constant 0 : index
    %3 = vector.load %arg4[%c0_3, %c0_4] : memref<1x128xf32, #tpu.memory_space<vmem>>, vector<1x128xf32>
    %4 = vector.broadcast %3 : vector<1x128xf32> to vector<128x128xf32>
    %5 = arith.addf %2, %4 : vector<128x128xf32>
    %c0_5 = arith.constant 0 : index
    %c0_6 = arith.constant 0 : index
    %6 = vector.load %arg5[%c0_5, %c0_6] : memref<128x128xf32, #tpu.memory_space<vmem>>, vector<128x128xf32>
    tpu.vector_store %arg5[%c0_5, %c0_6], %5 {strides = array<i32>} : memref<128x128xf32, #tpu.memory_space<vmem>>, vector<128x128xf32>,
    return
  }
  func.func @transform_0(%arg0: i32, %arg1: i32) -> (i32, i32) {
    %c0_i32 = arith.constant 0 : i32
    %c0_i32_0 = arith.constant 0 : i32
    return %arg0, %c0_i32 : i32, i32
  }
  func.func @transform_1(%arg0: i32, %arg1: i32) -> (i32, i32) {
    %c0_i32 = arith.constant 0 : i32
    %c0_i32_0 = arith.constant 0 : i32
    return %c0_i32, %arg1 : i32, i32
  }
  func.func @transform_2(%arg0: i32, %arg1: i32) -> (i32, i32) {
    %c0_i32 = arith.constant 0 : i32
    %c0_i32_0 = arith.constant 0 : i32
    return %c0_i32, %arg1 : i32, i32
  }
  func.func @transform_3(%arg0: i32, %arg1: i32) -> (i32, i32) {
    %c0_i32 = arith.constant 0 : i32
    return %arg0, %arg1 : i32, i32
  }
}

</mosaic_0001>

<llo_original>
// kernel: tpu_custom_call.1
$region0: #{tpu_custom_call.1}
  #allocation0 [shape = 'u32[]', space=smem, size = 0x4, offset = 0x4, fixed_abs, tag = 'smem constant byte address 0x4 - core index']
  #allocation1 [shape = 'u32[144,128]{1,0:T(1,128)}', space=vmem, size = 0x12000, scoped, tag = 'internal scratch']
  %s0 = inlined_call_operand.hbm [shape: f32[256,128], index: 0, kind: input, shape index: {}]
  %s1 = inlined_call_operand.hbm [shape: f32[128,128], index: 1, kind: input, shape index: {}]
  %s2 = inlined_call_operand.vmem [shape: f32[1,128], index: 2, kind: input, shape index: {}]
  %s3 = inlined_call_operand.hbm [shape: f32[256,128], index: 3, kind: output, shape index: {}]
  %s4 = sld [smem:[#allocation0]]
  $region53: #{tpu_custom_call.1} parent=0
    _
  %s6 = ssub.s32 1, %s4
  %s7 = scalar_select 0, %s6, %s4
  $region1: #{tpu_custom_call.1} parent=0
    #allocation2 [shape = 'u8[131072]{0}', space=vmem, size = 0x20000, scoped, tag = 'input window, operand 0']
    #allocation3 [shape = 's32[2]{0}', space=sflag, size = 0x8, scoped, tag = 'scoped memory for tpu_custom_call.1']
    #allocation4 [shape = 's32[2]{0}', space=sflag, size = 0x8, scoped, tag = 'scoped memory for tpu_custom_call.1']
    #allocation5 [shape = 'u8[65536]{0}', space=vmem, size = 0x10000, scoped, tag = 'input window, operand 1, single buffered']
    #allocation6 [shape = 's32[1]{0}', space=sflag, size = 0x4, scoped, tag = 'scoped memory for tpu_custom_call.1']
    #allocation7 [shape = 'u8[131072]{0}', space=vmem, size = 0x20000, scoped, tag = 'output window, operand 0']
    %8 = vsyncpa [#allocation3], 0
    %s9 = scalar_lea.sflag [#allocation3], 1
    %10 = vsyncpa %s9, 0
    %11 = vsyncpa [#allocation6], 0
    %12 = vsyncpa [#allocation4], 0
    %s13 = scalar_lea.sflag [#allocation4], 1
    %14 = vsyncpa %s13, 0
    loop: start=0, step=1, limit=4
    $region2: #{tpu_custom_call.1} parent=1 // loop_pre_header
      _
    $region3: #{tpu_custom_call.1} parent=1 // loop_header
      %s16 = sphi 0, %s20
      %p17 = scmp.ge.s32.totalorder %s16, 4
      %s23 = sphi 0, %s35
      %s24 = sphi 0, %s31
      %s25 = sphi 0, %s23
      %s26 = sphi 0, %s24
      %s27 = sphi 0, %s25
      %s28 = sphi 0, %s26
      %s38 = sphi 0, %s40
      %s41 = sphi 0, %s38
      %s42 = sphi 0, %s41
      %s58 = sphi 0, %s42
      %s64 = sphi 0, %s66
      %s67 = sphi 0, %s64
      %s68 = sphi 0, %s67
      %s84 = sphi 0, %s68
      %s90 = sphi 0, %s92
      %s93 = sphi 0, %s90
      %s94 = sphi 0, %s93
      %s110 = sphi 0, %s94
      %s118 = sphi 0, %s120
      %s121 = sphi 0, %s118
      %s122 = sphi 0, %s121
      %s138 = sphi 0, %s122
    $region4: #{tpu_custom_call.1} parent=1 // loop_header_branch
      %19 = sbr.rel (%p17) target = $region8
    $region5: #{tpu_custom_call.1} parent=1 // loop_body
      %s21 = ssub.s32 %s16, 1
      %s22 = ssub.s32 %s16, 2
      %s29 = sadd.s32 1, %s24
      %p30 = scmp.ge.s32.totalorder %s29, 1
      %s31 = scalar_select %p30, 0, %s29
      %s32 = sadd.s32 1, %s23
      %s33 = scalar_select %p30, %s32, %s23
      %p34 = scmp.ge.s32.totalorder %s33, 2
      %s35 = scalar_select %p34, 0, %s33
      %s36 = ssub.s32 %s23, %s35
      %p37 = scmp.eq.s32.totalorder %s36, 0
      %s39 = sadd.s32 %s38, 1
      %s40 = scalar_select %p37, %s38, %s39
      %p43 = pneg %p37
      %p44 = scmp.eq.s32.totalorder %s16, 1
      %p45 = por %p43, %p44
      %p46 = scmp.ne.s32.totalorder %s38, %s41
      %p47 = scmp.eq.s32.totalorder %s16, 0
      %p48 = por %p46, %p47
      %p49 = scmp.ne.s32.totalorder %s38, %s41
      %p50 = scmp.eq.s32.totalorder %s21, 1
      %p51 = por %p49, %p50
      %p52 = scmp.ne.s32.totalorder %s41, %s42
      %p53 = scmp.eq.s32.totalorder %s21, 0
      %p54 = por %p52, %p53
      %p55 = scmp.ne.s32.totalorder %s41, %s42
      %p56 = scmp.eq.s32.totalorder %s22, 1
      %p57 = por %p55, %p56
      %p59 = scmp.ne.s32.totalorder %s42, %s58
      %p60 = scmp.eq.s32.totalorder %s22, 0
      %p61 = por %p59, %p60
      %s62 = ssub.s32 %s24, %s31
      %p63 = scmp.eq.s32.totalorder %s62, 0
      %s65 = sadd.s32 %s64, 1
      %s66 = scalar_select %p63, %s64, %s65
      %p69 = pneg %p63
      %p70 = scmp.eq.s32.totalorder %s16, 1
      %p71 = por %p69, %p70
      %p72 = scmp.ne.s32.totalorder %s64, %s67
      %p73 = scmp.eq.s32.totalorder %s16, 0
      %p74 = por %p72, %p73
      %p75 = scmp.ne.s32.totalorder %s64, %s67
      %p76 = scmp.eq.s32.totalorder %s21, 1
      %p77 = por %p75, %p76
      %p78 = scmp.ne.s32.totalorder %s67, %s68
      %p79 = scmp.eq.s32.totalorder %s21, 0
      %p80 = por %p78, %p79
      %p81 = scmp.ne.s32.totalorder %s67, %s68
      %p82 = scmp.eq.s32.totalorder %s22, 1
      %p83 = por %p81, %p82
      %p85 = scmp.ne.s32.totalorder %s68, %s84
      %p86 = scmp.eq.s32.totalorder %s22, 0
      %p87 = por %p85, %p86
      %s88 = ssub.s32 %s24, %s31
      %p89 = scmp.eq.s32.totalorder %s88, 0
      %s91 = sadd.s32 %s90, 1
      %s92 = scalar_select %p89, %s90, %s91
      %p95 = pneg %p89
      %p96 = scmp.eq.s32.totalorder %s16, 1
      %p97 = por %p95, %p96
      %p98 = scmp.ne.s32.totalorder %s90, %s93
      %p99 = scmp.eq.s32.totalorder %s16, 0
      %p100 = por %p98, %p99
      %p101 = scmp.ne.s32.totalorder %s90, %s93
      %p102 = scmp.eq.s32.totalorder %s21, 1
      %p103 = por %p101, %p102
      %p104 = scmp.ne.s32.totalorder %s93, %s94
      %p105 = scmp.eq.s32.totalorder %s21, 0
      %p106 = por %p104, %p105
      %p107 = scmp.ne.s32.totalorder %s93, %s94
      %p108 = scmp.eq.s32.totalorder %s22, 1
      %p109 = por %p107, %p108
      %p111 = scmp.ne.s32.totalorder %s94, %s110
      %p112 = scmp.eq.s32.totalorder %s22, 0
      %p113 = por %p111, %p112
      %s114 = ssub.s32 %s23, %s35
      %s115 = ssub.s32 %s24, %s31
      %s116 = sor.u32 %s114, %s115
      %p117 = scmp.eq.s32.totalorder %s116, 0
      %s119 = sadd.s32 %s118, 1
      %s120 = scalar_select %p117, %s118, %s119
      %p123 = pneg %p117
      %p124 = scmp.eq.s32.totalorder %s16, 1
      %p125 = por %p123, %p124
      %p126 = scmp.ne.s32.totalorder %s118, %s121
      %p127 = scmp.eq.s32.totalorder %s16, 0
      %p128 = por %p126, %p127
      %p129 = scmp.ne.s32.totalorder %s118, %s121
      %p130 = scmp.eq.s32.totalorder %s21, 1
      %p131 = por %p129, %p130
      %p132 = scmp.ne.s32.totalorder %s121, %s122
      %p133 = scmp.eq.s32.totalorder %s21, 0
      %p134 = por %p132, %p133
      %p135 = scmp.ne.s32.totalorder %s121, %s122
      %p136 = scmp.eq.s32.totalorder %s22, 1
      %p137 = por %p135, %p136
      %p139 = scmp.ne.s32.totalorder %s122, %s138
      %p140 = scmp.eq.s32.totalorder %s22, 0
      %p141 = por %p139, %p140
      %p142 = scmp.le.s32.totalorder 1, %s16
      %p143 = scmp.lt.s32.totalorder %s16, 3
      %p144 = pnand %p142, %p143
      %p145 = pneg %p144
      // Predicated region
      $region9: #{tpu_custom_call.1} parent=5 // pred_check
        _
      $region10: #{tpu_custom_call.1} parent=5 // pred_check_branch
        %147 = sbr.rel (%p144) target = $region12
      $region11: #{tpu_custom_call.1} parent=5 // pred_region
        %s148 = ssub.s32 %s16, 1
        // Predicated region
        $region13: #{tpu_custom_call.1} parent=11 // pred_check
          %p149 = pneg %p80
        $region14: #{tpu_custom_call.1} parent=11 // pred_check_branch
          %151 = sbr.rel (%p149) target = $region16
        $region15: #{tpu_custom_call.1} parent=11 // pred_region
          %s153 = ssub.s32 2048, 2048
          %154 = vsyncadd [#allocation6], %s153
          %s155 = smul.addr %s26, 128
          %s156 = scalar_lea.hbm %s1, %s155
          %s157 = sshll.u32 [#allocation5], 4
          %s158 = int_to_ptr.vmem [resolvable:$true] %s157
          %163 = dma.hbm_to_vmem [thread:$0]  %s156, 2048, %s158, [#allocation6], 128, 128, 8
        $region16: #{tpu_custom_call.1} parent=11 // pred_fallthru
          _
        // Predicated region
        $region17: #{tpu_custom_call.1} parent=11 // pred_check
          %p164 = pneg %p106
        $region18: #{tpu_custom_call.1} parent=11 // pred_check_branch
          %166 = sbr.rel (%p164) target = $region20
        $region19: #{tpu_custom_call.1} parent=11 // pred_region
          %p167 = scmp.lt.s32.totalorder %s26, 0
          %s168 = scalar_select %p167, %s26, 0
          %s169 = scalar_lea.vmem %s2, %s168
        $region20: #{tpu_custom_call.1} parent=11 // pred_fallthru
          _
      $region12: #{tpu_custom_call.1} parent=5 // pred_fallthru
        _
      %p170 = scmp.lt.s32.totalorder %s16, 2
      // Predicated region
      $region21: #{tpu_custom_call.1} parent=5 // pred_check
        %p171 = pneg %p170
      $region22: #{tpu_custom_call.1} parent=5 // pred_check_branch
        %173 = sbr.rel (%p171) target = $region24
      $region23: #{tpu_custom_call.1} parent=5 // pred_region
        // Predicated region
        $region25: #{tpu_custom_call.1} parent=23 // pred_check
          %p174 = pneg %p48
        $region26: #{tpu_custom_call.1} parent=23 // pred_check_branch
          %176 = sbr.rel (%p174) target = $region28
        $region27: #{tpu_custom_call.1} parent=23 // pred_region
          %s177 = sand.u32 %s38, 1
          %s178 = scalar_lea.sflag [#allocation3], %s177
          %s179 = sand.u32 %s38, 1
          %s180 = smul.addr %s179, 128
          %s181 = scalar_lea.vmem [#allocation2], %s180
          %s182 = smul.u32 16, %s23
          %s184 = ssub.s32 2048, 2048
          %185 = vsyncadd %s178, %s184
          %s186 = smul.addr %s182, 128
          %s187 = scalar_lea.hbm %s0, %s186
          %s188 = sshll.u32 %s181, 4
          %s189 = int_to_ptr.vmem [resolvable:$true] %s188
          %194 = dma.hbm_to_vmem [thread:$0]  %s187, 2048, %s189, %s178, 128, 128, 8
        $region28: #{tpu_custom_call.1} parent=23 // pred_fallthru
          _
      $region24: #{tpu_custom_call.1} parent=5 // pred_fallthru
        _
      %p195 = scmp.le.s32.totalorder 1, %s16
      %p196 = scmp.lt.s32.totalorder %s16, 3
      %p197 = pnand %p195, %p196
      %p198 = pneg %p197
      // Predicated region
      $region29: #{tpu_custom_call.1} parent=5 // pred_check
        _
      $region30: #{tpu_custom_call.1} parent=5 // pred_check_branch
        %200 = sbr.rel (%p197) target = $region32
      $region31: #{tpu_custom_call.1} parent=5 // pred_region
        %s201 = ssub.s32 %s16, 1
        %s202 = sand.u32 %s41, 1
        %s203 = scalar_lea.sflag [#allocation3], %s202
        %s204 = sand.u32 %s41, 1
        %s205 = smul.addr %s204, 128
        %s206 = scalar_lea.vmem [#allocation2], %s205
        // Predicated region
        $region33: #{tpu_custom_call.1} parent=31 // pred_check
          %p207 = pneg %p54
        $region34: #{tpu_custom_call.1} parent=31 // pred_check_branch
          %209 = sbr.rel (%p207) target = $region36
        $region35: #{tpu_custom_call.1} parent=31 // pred_region
          %210 = dma.done %s203, 2048
        $region36: #{tpu_custom_call.1} parent=31 // pred_fallthru
          _
        // Predicated region
        $region37: #{tpu_custom_call.1} parent=31 // pred_check
          %p211 = pneg %p80
        $region38: #{tpu_custom_call.1} parent=31 // pred_check_branch
          %213 = sbr.rel (%p211) target = $region40
        $region39: #{tpu_custom_call.1} parent=31 // pred_region
          %214 = dma.done [#allocation6], 2048
        $region40: #{tpu_custom_call.1} parent=31 // pred_fallthru
          _
        %s215 = sand.u32 %s41, 1
        %s216 = scalar_lea.sflag [#allocation3], %s215
        %s217 = sand.u32 %s41, 1
        %s218 = smul.addr %s217, 128
        %s219 = scalar_lea.vmem [#allocation2], %s218
        %p220 = pneg %p54
        %p221 = pneg %p51
        %p222 = pneg %p80
        %p223 = pneg %p77
        %p224 = scmp.lt.s32.totalorder %s26, 0
        %s225 = scalar_select %p224, %s26, 0
        %s226 = scalar_lea.vmem %s2, %s225
        %p227 = pneg %p106
        %p228 = pneg %p103
        %p229 = pneg %p134
        %p230 = pneg %p131
        %s231 = sand.u32 %s121, 1
        %s232 = scalar_lea.sflag [#allocation4], %s231
        %s233 = sand.u32 %s121, 1
        %s234 = smul.addr %s233, 128
        %s235 = scalar_lea.vmem [#allocation7], %s234
        %s236 = smul.u32 16, %s25
        %p237 = scmp.lt.s32.totalorder %s26, 0
        %s238 = scalar_select %p237, %s26, 0
        %s239 = scalar_lea.vmem %s2, %s238
        %s240 = smul.u32 16, %s25
        %v241 = vld [vmem:[%s206] sm:$0xff]
        %v242 = vld [vmem:[%s206 + $0x8] sm:$0xff]
        %v243 = vld [vmem:[%s206 + $0x10] sm:$0xff]
        %v244 = vld [vmem:[%s206 + $0x18] sm:$0xff]
        %v245 = vld [vmem:[%s206 + $0x20] sm:$0xff]
        %v246 = vld [vmem:[%s206 + $0x28] sm:$0xff]
        %v247 = vld [vmem:[%s206 + $0x30] sm:$0xff]
        %v248 = vld [vmem:[%s206 + $0x38] sm:$0xff]
        %v249 = vld [vmem:[%s206 + $0x40] sm:$0xff]
        %v250 = vld [vmem:[%s206 + $0x48] sm:$0xff]
        %v251 = vld [vmem:[%s206 + $0x50] sm:$0xff]
        %v252 = vld [vmem:[%s206 + $0x58] sm:$0xff]
        %v253 = vld [vmem:[%s206 + $0x60] sm:$0xff]
        %v254 = vld [vmem:[%s206 + $0x68] sm:$0xff]
        %v255 = vld [vmem:[%s206 + $0x70] sm:$0xff]
        %v256 = vld [vmem:[%s206 + $0x78] sm:$0xff]
        %v257 = vld [vmem:[#allocation5] sm:$0xff]
        %v258 = vld [vmem:[#allocation5 + $0x8] sm:$0xff]
        %v259 = vld [vmem:[#allocation5 + $0x10] sm:$0xff]
        %v260 = vld [vmem:[#allocation5 + $0x18] sm:$0xff]
        %v261 = vld [vmem:[#allocation5 + $0x20] sm:$0xff]
        %v262 = vld [vmem:[#allocation5 + $0x28] sm:$0xff]
        %v263 = vld [vmem:[#allocation5 + $0x30] sm:$0xff]
        %v264 = vld [vmem:[#allocation5 + $0x38] sm:$0xff]
        %v265 = vld [vmem:[#allocation5 + $0x40] sm:$0xff]
        %v266 = vld [vmem:[#allocation5 + $0x48] sm:$0xff]
        %v267 = vld [vmem:[#allocation5 + $0x50] sm:$0xff]
        %v268 = vld [vmem:[#allocation5 + $0x58] sm:$0xff]
        %v269 = vld [vmem:[#allocation5 + $0x60] sm:$0xff]
        %v270 = vld [vmem:[#allocation5 + $0x68] sm:$0xff]
        %v271 = vld [vmem:[#allocation5 + $0x70] sm:$0xff]
        %v272 = vld [vmem:[#allocation5 + $0x78] sm:$0xff]
        %v273 = vld [vmem:[%s239] sm:$0x1]
        %v275 = vlaneseq
        %v276 = vshrl.u32 %v275, 7
        %v277 = vsub.s32 0, %v276
        %v278 = vrot.slane %v273, %v277
        %280 = vmatprep.subr.mxu0 0.0
        %281 = vmatpush1.msra.mxu0 %v257
        %282 = vmatprep.subr.mxu0 0.0
        %283 = vmatpush1.msra.mxu0 %v258
        %284 = vmatprep.subr.mxu0 0.0
        %285 = vmatpush1.msra.mxu0 %v259
        %286 = vmatprep.subr.mxu0 0.0
        %287 = vmatpush1.msra.mxu0 %v260
        %288 = vmatprep.subr.mxu0 0.0
        %289 = vmatpush1.msra.mxu0 %v261
        %290 = vmatprep.subr.mxu0 0.0
        %291 = vmatpush1.msra.mxu0 %v262
        %292 = vmatprep.subr.mxu0 0.0
        %293 = vmatpush1.msra.mxu0 %v263
        %294 = vmatprep.subr.mxu0 0.0
        %295 = vmatpush1.msra.mxu0 %v264
        %296 = vmatprep.subr.mxu0 0.0
        %297 = vmatpush1.msra.mxu0 %v265
        %298 = vmatprep.subr.mxu0 0.0
        %299 = vmatpush1.msra.mxu0 %v266
        %300 = vmatprep.subr.mxu0 0.0
        %301 = vmatpush1.msra.mxu0 %v267
        %302 = vmatprep.subr.mxu0 0.0
        %303 = vmatpush1.msra.mxu0 %v268
        %304 = vmatprep.subr.mxu0 0.0
        %305 = vmatpush1.msra.mxu0 %v269
        %306 = vmatprep.subr.mxu0 0.0
        %307 = vmatpush1.msra.mxu0 %v270
        %308 = vmatprep.subr.mxu0 0.0
        %309 = vmatpush1.msra.mxu0 %v271
        %310 = vmatprep.subr.mxu0 0.0
        %311 = vmatpush1.msra.mxu0 %v272
        %312 = vmatprep.subr.mxu0 0.0
        %313 = vmatpush1.msra.mxu0 0.0
        %314 = vmatprep.subr.mxu0 0.0
        %315 = vmatpush1.msra.mxu0 0.0
        %316 = vmatprep.subr.mxu0 0.0
        %317 = vmatpush1.msra.mxu0 0.0
        %318 = vmatprep.subr.mxu0 0.0
        %319 = vmatpush1.msra.mxu0 0.0
        %320 = vmatprep.subr.mxu0 0.0
        %321 = vmatpush1.msra.mxu0 0.0
        %322 = vmatprep.subr.mxu0 0.0
        %323 = vmatpush1.msra.mxu0 0.0
        %324 = vmatprep.subr.mxu0 0.0
        %325 = vmatpush1.msra.mxu0 0.0
        %326 = vmatprep.subr.mxu0 0.0
        %327 = vmatpush1.msra.mxu0 0.0
        %328 = vmatprep.subr.mxu0 0.0
        %329 = vmatpush1.msra.mxu0 0.0
        %330 = vmatprep.subr.mxu0 0.0
        %331 = vmatpush1.msra.mxu0 0.0
        %332 = vmatprep.subr.mxu0 0.0
        %333 = vmatpush1.msra.mxu0 0.0
        %334 = vmatprep.subr.mxu0 0.0
        %335 = vmatpush1.msra.mxu0 0.0
        %336 = vmatprep.subr.mxu0 0.0
        %337 = vmatpush1.msra.mxu0 0.0
        %338 = vmatprep.subr.mxu0 0.0
        %339 = vmatpush1.msra.mxu0 0.0
        %340 = vmatprep.subr.mxu0 0.0
        %341 = vmatpush1.msra.mxu0 0.0
        %342 = vmatprep.subr.mxu0 0.0
        %343 = vmatpush1.msra.mxu0 0.0
        %344 = vmatprep.mubr.f32.mxu0 0.0
        %345 = vmatmul.mubr.f32.gmra.mrb[0].mxu0 %v241
        %v346 = vpop.f32.mrb[0].mxu0
        %v347 = vadd.f32 %v278, %v346
        %v348 = vpop.f32.mrb[0].mxu0
        %349 = vmatprep.mubr.f32.mxu0 0.0
        %350 = vmatmul.mubr.f32.gmra.mrb[0].mxu0 %v242
        %v351 = vpop.f32.mrb[0].mxu0
        %v352 = vadd.f32 %v278, %v351
        %v353 = vpop.f32.mrb[0].mxu0
        %354 = vmatprep.mubr.f32.mxu0 0.0
        %355 = vmatmul.mubr.f32.gmra.mrb[0].mxu0 %v243
        %v356 = vpop.f32.mrb[0].mxu0
        %v357 = vadd.f32 %v278, %v356
        %v358 = vpop.f32.mrb[0].mxu0
        %359 = vmatprep.mubr.f32.mxu0 0.0
        %360 = vmatmul.mubr.f32.gmra.mrb[0].mxu0 %v244
        %v361 = vpop.f32.mrb[0].mxu0
        %v362 = vadd.f32 %v278, %v361
        %v363 = vpop.f32.mrb[0].mxu0
        %364 = vmatprep.mubr.f32.mxu0 0.0
        %365 = vmatmul.mubr.f32.gmra.mrb[0].mxu0 %v245
        %v366 = vpop.f32.mrb[0].mxu0
        %v367 = vadd.f32 %v278, %v366
        %v368 = vpop.f32.mrb[0].mxu0
        %369 = vmatprep.mubr.f32.mxu0 0.0
        %370 = vmatmul.mubr.f32.gmra.mrb[0].mxu0 %v246
        %v371 = vpop.f32.mrb[0].mxu0
        %v372 = vadd.f32 %v278, %v371
        %v373 = vpop.f32.mrb[0].mxu0
        %374 = vmatprep.mubr.f32.mxu0 0.0
        %375 = vmatmul.mubr.f32.gmra.mrb[0].mxu0 %v247
        %v376 = vpop.f32.mrb[0].mxu0
        %v377 = vadd.f32 %v278, %v376
        %v378 = vpop.f32.mrb[0].mxu0
        %379 = vmatprep.mubr.f32.mxu0 0.0
        %380 = vmatmul.mubr.f32.gmra.mrb[0].mxu0 %v248
        %v381 = vpop.f32.mrb[0].mxu0
        %v382 = vadd.f32 %v278, %v381
        %v383 = vpop.f32.mrb[0].mxu0
        %384 = vmatprep.mubr.f32.mxu0 0.0
        %385 = vmatmul.mubr.f32.gmra.mrb[0].mxu0 %v249
        %v386 = vpop.f32.mrb[0].mxu0
        %v387 = vadd.f32 %v278, %v386
        %v388 = vpop.f32.mrb[0].mxu0
        %389 = vmatprep.mubr.f32.mxu0 0.0
        %390 = vmatmul.mubr.f32.gmra.mrb[0].mxu0 %v250
        %v391 = vpop.f32.mrb[0].mxu0
        %v392 = vadd.f32 %v278, %v391
        %v393 = vpop.f32.mrb[0].mxu0
        %394 = vmatprep.mubr.f32.mxu0 0.0
        %395 = vmatmul.mubr.f32.gmra.mrb[0].mxu0 %v251
        %v396 = vpop.f32.mrb[0].mxu0
        %v397 = vadd.f32 %v278, %v396
        %v398 = vpop.f32.mrb[0].mxu0
        %399 = vmatprep.mubr.f32.mxu0 0.0
        %400 = vmatmul.mubr.f32.gmra.mrb[0].mxu0 %v252
        %v401 = vpop.f32.mrb[0].mxu0
        %v402 = vadd.f32 %v278, %v401
        %v403 = vpop.f32.mrb[0].mxu0
        %404 = vmatprep.mubr.f32.mxu0 0.0
        %405 = vmatmul.mubr.f32.gmra.mrb[0].mxu0 %v253
        %v406 = vpop.f32.mrb[0].mxu0
        %v407 = vadd.f32 %v278, %v406
        %v408 = vpop.f32.mrb[0].mxu0
        %409 = vmatprep.mubr.f32.mxu0 0.0
        %410 = vmatmul.mubr.f32.gmra.mrb[0].mxu0 %v254
        %v411 = vpop.f32.mrb[0].mxu0
        %v412 = vadd.f32 %v278, %v411
        %v413 = vpop.f32.mrb[0].mxu0
        %414 = vmatprep.mubr.f32.mxu0 0.0
        %415 = vmatmul.mubr.f32.gmra.mrb[0].mxu0 %v255
        %v416 = vpop.f32.mrb[0].mxu0
        %v417 = vadd.f32 %v278, %v416
        %v418 = vpop.f32.mrb[0].mxu0
        %419 = vmatprep.mubr.f32.mxu0 0.0
        %420 = vmatmul.mubr.f32.gmra.mrb[0].mxu0 %v256
        %v421 = vpop.f32.mrb[0].mxu0
        %v422 = vadd.f32 %v278, %v421
        %v423 = vpop.f32.mrb[0].mxu0
        %424 = vdwg.mxu0
        %425 = vst [vmem:[%s235] sm:$0xff] %v347
        %426 = vst [vmem:[%s235 + $0x8] sm:$0xff] %v352
        %427 = vst [vmem:[%s235 + $0x10] sm:$0xff] %v357
        %428 = vst [vmem:[%s235 + $0x18] sm:$0xff] %v362
        %429 = vst [vmem:[%s235 + $0x20] sm:$0xff] %v367
        %430 = vst [vmem:[%s235 + $0x28] sm:$0xff] %v372
        %431 = vst [vmem:[%s235 + $0x30] sm:$0xff] %v377
        %432 = vst [vmem:[%s235 + $0x38] sm:$0xff] %v382
        %433 = vst [vmem:[%s235 + $0x40] sm:$0xff] %v387
        %434 = vst [vmem:[%s235 + $0x48] sm:$0xff] %v392
        %435 = vst [vmem:[%s235 + $0x50] sm:$0xff] %v397
        %436 = vst [vmem:[%s235 + $0x58] sm:$0xff] %v402
        %437 = vst [vmem:[%s235 + $0x60] sm:$0xff] %v407
        %438 = vst [vmem:[%s235 + $0x68] sm:$0xff] %v412
        %439 = vst [vmem:[%s235 + $0x70] sm:$0xff] %v417
        %440 = vst [vmem:[%s235 + $0x78] sm:$0xff] %v422
        %s441 = sand.u32 %s121, 1
        %s442 = scalar_lea.sflag [#allocation4], %s441
        %s443 = sand.u32 %s121, 1
        %s444 = smul.addr %s443, 128
        %s445 = scalar_lea.vmem [#allocation7], %s444
        // Predicated region
        $region41: #{tpu_custom_call.1} parent=31 // pred_check
          %p446 = pneg %p131
        $region42: #{tpu_custom_call.1} parent=31 // pred_check_branch
          %448 = sbr.rel (%p446) target = $region44
        $region43: #{tpu_custom_call.1} parent=31 // pred_region
          %s449 = smul.u32 16, %s25
          %s451 = ssub.s32 2048, 2048
          %452 = vsyncadd %s442, %s451
          %s453 = sadd.s32 %s26, %s449
          %s454 = smul.addr %s453, 128
          %s455 = scalar_lea.hbm %s3, %s454
          %s456 = sshll.u32 %s445, 4
          %s457 = int_to_ptr.vmem [resolvable:$true] %s456
          %462 = dma.vmem_to_hbm [thread:$0]  %s457, 2048, %s455, %s442, 128, 128, 8
        $region44: #{tpu_custom_call.1} parent=31 // pred_fallthru
          _
      $region32: #{tpu_custom_call.1} parent=5 // pred_fallthru
        _
      %p463 = scmp.le.s32.totalorder 2, %s16
      // Predicated region
      $region45: #{tpu_custom_call.1} parent=5 // pred_check
        %p464 = pneg %p463
      $region46: #{tpu_custom_call.1} parent=5 // pred_check_branch
        %466 = sbr.rel (%p464) target = $region48
      $region47: #{tpu_custom_call.1} parent=5 // pred_region
        %s467 = ssub.s32 %s16, 2
        // Predicated region
        $region49: #{tpu_custom_call.1} parent=47 // pred_check
          %p468 = pneg %p137
        $region50: #{tpu_custom_call.1} parent=47 // pred_check_branch
          %470 = sbr.rel (%p468) target = $region52
        $region51: #{tpu_custom_call.1} parent=47 // pred_region
          %s471 = sand.u32 %s122, 1
          %s472 = scalar_lea.sflag [#allocation4], %s471
          %s473 = sand.u32 %s122, 1
          %s474 = smul.addr %s473, 128
          %s475 = scalar_lea.vmem [#allocation7], %s474
          %476 = dma.done %s472, 2048
        $region52: #{tpu_custom_call.1} parent=47 // pred_fallthru
          _
      $region48: #{tpu_custom_call.1} parent=5 // pred_fallthru
        _
    $region6: #{tpu_custom_call.1} parent=1 // loop_footer
      %s20 = sadd.s32 1, %s16
    $region7: #{tpu_custom_call.1} parent=1 // loop_footer_branch
      %15 = sbr.rel target = $region3
    $region8: #{tpu_custom_call.1} parent=1 // loop_exit
      _
    %477 = vsyncpa [#allocation3], 1
    %s478 = scalar_lea.sflag [#allocation3], 1
    %479 = vsyncpa %s478, 1
    %480 = vsyncpa [#allocation6], 1
    %481 = vsyncpa [#allocation4], 1
    %s482 = scalar_lea.sflag [#allocation4], 1
    %483 = vsyncpa %s482, 1

</llo_original>
